<compile_context>
chip_gen: v5e
topology: v5e:2x2
jax: 0.10.0
libtpu: 0.0.40
codegen_flags: <defaults>
</compile_context>

<pallas_src>
import jax
import jax.numpy as jnp
from jax.experimental import pallas as pl
from jax.experimental.pallas import tpu as pltpu


def _class_head_kernel(x_ref, w_ref, b_ref, o_ref):
    # x_ref: (C, T)   w_ref: (O, C)   b_ref: (O, 1) f32   o_ref: (O, T)
    acc = jnp.dot(w_ref[...], x_ref[...], preferred_element_type=jnp.float32)
    o_ref[...] = (acc + b_ref[...]).astype(o_ref.dtype)


def _pick_tile_hw(hw, c, n, dtype_bytes, target_block_bytes):
    """Lane-aligned (multiple-of-128) HW tile sized so the input block is
    ~target_block_bytes, clamped to the (lane-rounded) HW extent, and reduced
    if needed so the grid has >= 2 total steps (keeps both v7x TCs busy)."""
    hw_ceil = ((hw + 127) // 128) * 128
    tile = max(128, (target_block_bytes // (c * dtype_bytes)) // 128 * 128)
    tile = min(tile, hw_ceil)

    def total_steps(t):
        return n * ((hw + t - 1) // t)

    while total_steps(tile) < 2 and tile > 128:
        tile = max(128, (tile // 2) // 128 * 128)
    return tile


def class_head_forward(x_nchw, weight, bias, num_anchors, *,
                       target_block_bytes=4 * 1024 * 1024):
    """x_nchw: (N, C, H, W); weight: (O, C) or Conv2d (O, C, 1, 1); bias: (O,)."""
    n, c, h, w = x_nchw.shape
    o = int(weight.shape[0])
    assert o == num_anchors * 2
    hw = h * w
    dtype_bytes = jnp.dtype(x_nchw.dtype).itemsize

    w_oc = weight.reshape(o, c).astype(x_nchw.dtype)   # (O, C), matmul dtype = input dtype
    b_2d = bias.reshape(o, 1).astype(jnp.float32)      # added onto the f32 accumulator

    # Free (contiguous) reshape — no transpose of the big input in HBM.
    x_flat = x_nchw.reshape(n, c, hw)

    tile = _pick_tile_hw(hw, c, n, dtype_bytes, target_block_bytes)
    num_tiles = (hw + tile - 1) // tile                 # partial last block is masked
    grid = (n, num_tiles)

    # Double-buffered input + output blocks, plus weights/bias, with 2x headroom.
    vmem_need = (2 * (c + o) * tile * dtype_bytes
                 + 4 * (o * c * dtype_bytes + o * 4))
    vmem_limit = int(min(max(2 * vmem_need, 16 * 1024 * 1024), 48 * 1024 * 1024))

    cost = pl.CostEstimate(
        flops=2 * n * o * c * hw,
        transcendentals=0,
        bytes_accessed=dtype_bytes * (n * c * hw + n * o * hw + o * c) + 4 * o,
    )

    out_nohw = pl.pallas_call(
        _class_head_kernel,
        out_shape=jax.ShapeDtypeStruct((n, o, hw), x_nchw.dtype),
        grid_spec=pltpu.PrefetchScalarGridSpec(
            num_scalar_prefetch=0,
            grid=grid,
            in_specs=[
                # (C, tile) input block: lane-dense contiguous slice of NCHW.
                pl.BlockSpec((None, c, tile), lambda i, t: (i, 0, t)),
                # Weight / bias: constant index maps -> VMEM-resident across grid.
                pl.BlockSpec((o, c), lambda i, t: (0, 0)),
                pl.BlockSpec((o, 1), lambda i, t: (0, 0)),
            ],
            # (O, tile) output block: lane dim multiple of 128 -> dense vst.
            out_specs=pl.BlockSpec((None, o, tile), lambda i, t: (i, 0, t)),
        ),
        compiler_params=pltpu.CompilerParams(
            dimension_semantics=("parallel", "parallel"),
            vmem_limit_bytes=vmem_limit),
        cost_estimate=cost,
    )(x_flat, w_oc, b_2d)

    # Tiny-output glue: (N, O, HW) -> (N, HW, O) -> (N, HW*num_anchors, 2),
    # identical to PyTorch permute(0, 2, 3, 1).contiguous().view(N, -1, 2).
    # TODO(synk): in a full RetinaFace graph, fold this permute (or the per-anchor
    # 2-class softmax) into the consumer instead of a standalone XLA transpose.
    return jnp.transpose(out_nohw, (0, 2, 1)).reshape(n, hw * num_anchors, 2)


if __name__ == "__main__":
    NUM_ANCHORS = 3
    O = NUM_ANCHORS * 2

    key = jax.random.PRNGKey(0)
    kx, kw, kb, kx2 = jax.random.split(key, 4)

    def ref_forward(x, weight, bias):
        nb = x.shape[0]
        out = jnp.einsum("nchw,oc->nohw", x, weight) + bias[None, :, None, None]
        return jnp.transpose(out, (0, 2, 3, 1)).reshape(nb, -1, 2)

    # Case 1: lane-aligned spatial (16x16) — the common fast path.
    N, C, H, W = 2, 64, 16, 16
    x = jax.random.normal(kx, (N, C, H, W), dtype=jnp.float32)
    weight = jax.random.normal(kw, (O, C), dtype=jnp.float32) * 0.05
    bias = jax.random.normal(kb, (O,), dtype=jnp.float32) * 0.05

    out = jax.block_until_ready(class_head_forward(x, weight, bias, NUM_ANCHORS))
    ref = ref_forward(x, weight, bias)
    assert out.shape == (N, H * W * NUM_ANCHORS, 2), out.shape
    assert jnp.allclose(out, ref, atol=1e-5, rtol=1e-5)

    # Case 2: spatial NOT a multiple of 128 (13x13 -> HW=169) — exercises the
    # masked partial last HW block (no full-extent fallback anymore).
    H2 = W2 = 13
    x2 = jax.random.normal(kx2, (N, C, H2, W2), dtype=jnp.float32)
    out2 = jax.block_until_ready(class_head_forward(x2, weight, bias, NUM_ANCHORS))
    ref2 = ref_forward(x2, weight, bias)
    assert out2.shape == (N, H2 * W2 * NUM_ANCHORS, 2), out2.shape
    assert jnp.allclose(out2, ref2, atol=1e-5, rtol=1e-5)

    print("KERNEL_OK")
</pallas_src>

<mosaic_0001>
module attributes {stable_mosaic.version = 11 : i64} {
  func.func @_class_head_kernel(%arg0: i32, %arg1: i32, %arg2: memref<1x64x256xf32, #tpu.memory_space<vmem>>, %arg3: memref<6x64xf32, #tpu.memory_space<vmem>>, %arg4: memref<6x1xf32, #tpu.memory_space<vmem>>, %arg5: memref<1x6x256xf32, #tpu.memory_space<vmem>>) attributes {dimension_semantics = [#tpu.dimension_semantics<parallel>, #tpu.dimension_semantics<parallel>], iteration_bounds = array<i64: 2, 1>, scalar_prefetch = 0 : i64, scratch_operands = 0 : i64, tpu.core_type = #tpu.core_type<tc>, window_params = [{transform_indices = @transform_0, window_bounds = array<i64: 1, 64, 256>}, {pipeline_mode = #tpu.pipeline_mode<synchronous>, transform_indices = @transform_1, window_bounds = array<i64: 6, 64>}, {pipeline_mode = #tpu.pipeline_mode<synchronous>, transform_indices = @transform_2, window_bounds = array<i64: 6, 1>}, {transform_indices = @transform_3, window_bounds = array<i64: 1, 6, 256>}]} {
    %c0 = arith.constant 0 : index
    %c0_0 = arith.constant 0 : index
    %0 = vector.load %arg3[%c0, %c0_0] : memref<6x64xf32, #tpu.memory_space<vmem>>, vector<6x64xf32>
    %c0_1 = arith.constant 0 : index
    %c0_2 = arith.constant 0 : index
    %c0_3 = arith.constant 0 : index
    %1 = vector.load %arg2[%c0_1, %c0_2, %c0_3] : memref<1x64x256xf32, #tpu.memory_space<vmem>>, vector<1x64x256xf32>
    %2 = vector.shape_cast %1 : vector<1x64x256xf32> to vector<64x256xf32>
    %cst = arith.constant dense<0.000000e+00> : vector<6x256xf32>
    %3 = tpu.matmul %0, %2, %cst {dimension_numbers = #tpu.dot_dimension_numbers<[1], [0], [0], [1], [0, 0, 1, 1], [], []>} : vector<6x64xf32>, vector<64x256xf32>, vector<6x256xf32> -> vector<6x256xf32>
    %c0_4 = arith.constant 0 : index
    %c0_5 = arith.constant 0 : index
    %4 = vector.load %arg4[%c0_4, %c0_5] : memref<6x1xf32, #tpu.memory_space<vmem>>, vector<6x1xf32>
    %5 = vector.broadcast %4 : vector<6x1xf32> to vector<6x256xf32>
    %6 = arith.addf %3, %5 : vector<6x256xf32>
    %c0_6 = arith.constant 0 : index
    %c0_7 = arith.constant 0 : index
    %c0_8 = arith.constant 0 : index
    %7 = vector.load %arg5[%c0_6, %c0_7, %c0_8] : memref<1x6x256xf32, #tpu.memory_space<vmem>>, vector<1x6x256xf32>
    %8 = vector.shape_cast %7 : vector<1x6x256xf32> to vector<6x256xf32>
    %9 = vector.shape_cast %6 : vector<6x256xf32> to vector<1x6x256xf32>
    tpu.vector_store %arg5[%c0_6, %c0_7, %c0_8], %9 {strides = array<i32>} : memref<1x6x256xf32, #tpu.memory_space<vmem>>, vector<1x6x256xf32>,
    return
  }
  func.func @transform_0(%arg0: i32, %arg1: i32) -> (i32, i32, i32) {
    %c0_i32 = arith.constant 0 : i32
    %c0_i32_0 = arith.constant 0 : i32
    return %arg0, %c0_i32, %arg1 : i32, i32, i32
  }
  func.func @transform_1(%arg0: i32, %arg1: i32) -> (i32, i32) {
    %c0_i32 = arith.constant 0 : i32
    %c0_i32_0 = arith.constant 0 : i32
    %c0_i32_1 = arith.constant 0 : i32
    return %c0_i32, %c0_i32_0 : i32, i32
  }
  func.func @transform_2(%arg0: i32, %arg1: i32) -> (i32, i32) {
    %c0_i32 = arith.constant 0 : i32
    %c0_i32_0 = arith.constant 0 : i32
    %c0_i32_1 = arith.constant 0 : i32
    return %c0_i32, %c0_i32_0 : i32, i32
  }
  func.func @transform_3(%arg0: i32, %arg1: i32) -> (i32, i32, i32) {
    %c0_i32 = arith.constant 0 : i32
    %c0_i32_0 = arith.constant 0 : i32
    return %arg0, %c0_i32, %arg1 : i32, i32, i32
  }
}

</mosaic_0001>

<llo_original>
// kernel: tpu_custom_call.1
$region0: #{tpu_custom_call.1}
  #allocation0 [shape = 'u32[]', space=smem, size = 0x4, offset = 0x4, fixed_abs, tag = 'smem constant byte address 0x4 - core index']
  #allocation1 [shape = 'u32[72,128]{1,0:T(1,128)}', space=vmem, size = 0x9000, scoped, tag = 'internal scratch']
  %s0 = inlined_call_operand.hbm [shape: f32[2,64,256], index: 0, kind: input, shape index: {}]
  %s1 = inlined_call_operand.vmem [shape: f32[6,64], index: 1, kind: input, shape index: {}]
  %s2 = inlined_call_operand.vmem [shape: f32[6,1], index: 2, kind: input, shape index: {}]
  %s3 = inlined_call_operand.vmem [shape: f32[2,6,256], index: 3, kind: output, shape index: {}]
  %s4 = sld [smem:[#allocation0]]
  $region49: #{tpu_custom_call.1} parent=0
    _
  %s6 = ssub.s32 1, %s4
  %s7 = scalar_select 0, %s6, %s4
  $region1: #{tpu_custom_call.1} parent=0
    #allocation2 [shape = 'u8[131072]{0}', space=vmem, size = 0x20000, scoped, tag = 'input window, operand 0']
    #allocation3 [shape = 's32[2]{0}', space=sflag, size = 0x8, scoped, tag = 'scoped memory for tpu_custom_call.1']
    %8 = vsyncpa [#allocation3], 0
    %s9 = scalar_lea.sflag [#allocation3], 1
    %10 = vsyncpa %s9, 0
    loop: start=0, step=1, limit=4
    $region2: #{tpu_custom_call.1} parent=1 // loop_pre_header
      _
    $region3: #{tpu_custom_call.1} parent=1 // loop_header
      %s12 = sphi 0, %s16
      %p13 = scmp.ge.s32.totalorder %s12, 4
      %s19 = sphi 0, %s31
      %s20 = sphi 0, %s27
      %s21 = sphi 0, %s19
      %s22 = sphi 0, %s20
      %s23 = sphi 0, %s21
      %s24 = sphi 0, %s22
      %s36 = sphi 0, %s38
      %s39 = sphi 0, %s36
      %s40 = sphi 0, %s39
      %s56 = sphi 0, %s40
      %s60 = sphi 0, %s60
      %s62 = sphi 0, %s60
      %s63 = sphi 0, %s62
      %s77 = sphi 0, %s63
      %s81 = sphi 0, %s81
      %s83 = sphi 0, %s81
      %s84 = sphi 0, %s83
      %s98 = sphi 0, %s84
      %s106 = sphi 0, %s108
      %s109 = sphi 0, %s106
      %s110 = sphi 0, %s109
      %s126 = sphi 0, %s110
    $region4: #{tpu_custom_call.1} parent=1 // loop_header_branch
      %15 = sbr.rel (%p13) target = $region8
    $region5: #{tpu_custom_call.1} parent=1 // loop_body
      %s17 = ssub.s32 %s12, 1
      %s18 = ssub.s32 %s12, 2
      %s25 = sadd.s32 1, %s20
      %p26 = scmp.ge.s32.totalorder %s25, 1
      %s27 = scalar_select %p26, 0, %s25
      %s28 = sadd.s32 1, %s19
      %s29 = scalar_select %p26, %s28, %s19
      %p30 = scmp.ge.s32.totalorder %s29, 2
      %s31 = scalar_select %p30, 0, %s29
      %s32 = ssub.s32 %s19, %s31
      %s33 = ssub.s32 %s20, %s27
      %s34 = sor.u32 %s32, %s33
      %p35 = scmp.eq.s32.totalorder %s34, 0
      %s37 = sadd.s32 %s36, 1
      %s38 = scalar_select %p35, %s36, %s37
      %p41 = pneg %p35
      %p42 = scmp.eq.s32.totalorder %s12, 1
      %p43 = por %p41, %p42
      %p44 = scmp.ne.s32.totalorder %s36, %s39
      %p45 = scmp.eq.s32.totalorder %s12, 0
      %p46 = por %p44, %p45
      %p47 = scmp.ne.s32.totalorder %s36, %s39
      %p48 = scmp.eq.s32.totalorder %s17, 1
      %p49 = por %p47, %p48
      %p50 = scmp.ne.s32.totalorder %s39, %s40
      %p51 = scmp.eq.s32.totalorder %s17, 0
      %p52 = por %p50, %p51
      %p53 = scmp.ne.s32.totalorder %s39, %s40
      %p54 = scmp.eq.s32.totalorder %s18, 1
      %p55 = por %p53, %p54
      %p57 = scmp.ne.s32.totalorder %s40, %s56
      %p58 = scmp.eq.s32.totalorder %s18, 0
      %p59 = por %p57, %p58
      %s61 = sadd.s32 %s60, 1
      %p64 = scmp.eq.s32.totalorder %s12, 1
      %p65 = scmp.ne.s32.totalorder %s60, %s62
      %p66 = scmp.eq.s32.totalorder %s12, 0
      %p67 = por %p65, %p66
      %p68 = scmp.ne.s32.totalorder %s60, %s62
      %p69 = scmp.eq.s32.totalorder %s17, 1
      %p70 = por %p68, %p69
      %p71 = scmp.ne.s32.totalorder %s62, %s63
      %p72 = scmp.eq.s32.totalorder %s17, 0
      %p73 = por %p71, %p72
      %p74 = scmp.ne.s32.totalorder %s62, %s63
      %p75 = scmp.eq.s32.totalorder %s18, 1
      %p76 = por %p74, %p75
      %p78 = scmp.ne.s32.totalorder %s63, %s77
      %p79 = scmp.eq.s32.totalorder %s18, 0
      %p80 = por %p78, %p79
      %s82 = sadd.s32 %s81, 1
      %p85 = scmp.eq.s32.totalorder %s12, 1
      %p86 = scmp.ne.s32.totalorder %s81, %s83
      %p87 = scmp.eq.s32.totalorder %s12, 0
      %p88 = por %p86, %p87
      %p89 = scmp.ne.s32.totalorder %s81, %s83
      %p90 = scmp.eq.s32.totalorder %s17, 1
      %p91 = por %p89, %p90
      %p92 = scmp.ne.s32.totalorder %s83, %s84
      %p93 = scmp.eq.s32.totalorder %s17, 0
      %p94 = por %p92, %p93
      %p95 = scmp.ne.s32.totalorder %s83, %s84
      %p96 = scmp.eq.s32.totalorder %s18, 1
      %p97 = por %p95, %p96
      %p99 = scmp.ne.s32.totalorder %s84, %s98
      %p100 = scmp.eq.s32.totalorder %s18, 0
      %p101 = por %p99, %p100
      %s102 = ssub.s32 %s19, %s31
      %s103 = ssub.s32 %s20, %s27
      %s104 = sor.u32 %s102, %s103
      %p105 = scmp.eq.s32.totalorder %s104, 0
      %s107 = sadd.s32 %s106, 1
      %s108 = scalar_select %p105, %s106, %s107
      %p111 = pneg %p105
      %p112 = scmp.eq.s32.totalorder %s12, 1
      %p113 = por %p111, %p112
      %p114 = scmp.ne.s32.totalorder %s106, %s109
      %p115 = scmp.eq.s32.totalorder %s12, 0
      %p116 = por %p114, %p115
      %p117 = scmp.ne.s32.totalorder %s106, %s109
      %p118 = scmp.eq.s32.totalorder %s17, 1
      %p119 = por %p117, %p118
      %p120 = scmp.ne.s32.totalorder %s109, %s110
      %p121 = scmp.eq.s32.totalorder %s17, 0
      %p122 = por %p120, %p121
      %p123 = scmp.ne.s32.totalorder %s109, %s110
      %p124 = scmp.eq.s32.totalorder %s18, 1
      %p125 = por %p123, %p124
      %p127 = scmp.ne.s32.totalorder %s110, %s126
      %p128 = scmp.eq.s32.totalorder %s18, 0
      %p129 = por %p127, %p128
      %p130 = scmp.le.s32.totalorder 1, %s12
      %p131 = scmp.lt.s32.totalorder %s12, 3
      %p132 = pnand %p130, %p131
      %p133 = pneg %p132
      // Predicated region
      $region9: #{tpu_custom_call.1} parent=5 // pred_check
        _
      $region10: #{tpu_custom_call.1} parent=5 // pred_check_branch
        %135 = sbr.rel (%p132) target = $region12
      $region11: #{tpu_custom_call.1} parent=5 // pred_region
        %s136 = ssub.s32 %s12, 1
        // Predicated region
        $region13: #{tpu_custom_call.1} parent=11 // pred_check
          %p137 = pneg %p73
        $region14: #{tpu_custom_call.1} parent=11 // pred_check_branch
          %139 = sbr.rel (%p137) target = $region16
        $region15: #{tpu_custom_call.1} parent=11 // pred_region
          _
        $region16: #{tpu_custom_call.1} parent=11 // pred_fallthru
          _
        // Predicated region
        $region17: #{tpu_custom_call.1} parent=11 // pred_check
          %p140 = pneg %p94
        $region18: #{tpu_custom_call.1} parent=11 // pred_check_branch
          %142 = sbr.rel (%p140) target = $region20
        $region19: #{tpu_custom_call.1} parent=11 // pred_region
          _
        $region20: #{tpu_custom_call.1} parent=11 // pred_fallthru
          _
      $region12: #{tpu_custom_call.1} parent=5 // pred_fallthru
        _
      %p143 = scmp.lt.s32.totalorder %s12, 2
      // Predicated region
      $region21: #{tpu_custom_call.1} parent=5 // pred_check
        %p144 = pneg %p143
      $region22: #{tpu_custom_call.1} parent=5 // pred_check_branch
        %146 = sbr.rel (%p144) target = $region24
      $region23: #{tpu_custom_call.1} parent=5 // pred_region
        // Predicated region
        $region25: #{tpu_custom_call.1} parent=23 // pred_check
          %p147 = pneg %p46
        $region26: #{tpu_custom_call.1} parent=23 // pred_check_branch
          %149 = sbr.rel (%p147) target = $region28
        $region27: #{tpu_custom_call.1} parent=23 // pred_region
          %s150 = sand.u32 %s36, 1
          %s151 = scalar_lea.sflag [#allocation3], %s150
          %s152 = sand.u32 %s36, 1
          %s153 = smul.addr %s152, 128
          %s154 = scalar_lea.vmem [#allocation2], %s153
          %s155 = smul.u32 2, %s20
          %157 = vsyncadd %s151, 0
          %s158 = smul.addr %s19, 16
          %s159 = sadd.s32 %s155, %s158
          %s160 = smul.addr %s159, 8
          %s161 = scalar_lea.hbm %s0, %s160
          %s162 = sshll.u32 %s161, 4
          %s163 = int_to_ptr.hbm [resolvable:$true] %s162
          %s164 = sshll.u32 %s154, 4
          %s165 = int_to_ptr.vmem [resolvable:$true] %s164
          %170 = dma.hbm_to_vmem [thread:$0]  %s163, 2048, %s165, %s151, 256, 256, 16
        $region28: #{tpu_custom_call.1} parent=23 // pred_fallthru
          _
      $region24: #{tpu_custom_call.1} parent=5 // pred_fallthru
        _
      %p171 = scmp.le.s32.totalorder 1, %s12
      %p172 = scmp.lt.s32.totalorder %s12, 3
      %p173 = pnand %p171, %p172
      %p174 = pneg %p173
      // Predicated region
      $region29: #{tpu_custom_call.1} parent=5 // pred_check
        _
      $region30: #{tpu_custom_call.1} parent=5 // pred_check_branch
        %176 = sbr.rel (%p173) target = $region32
      $region31: #{tpu_custom_call.1} parent=5 // pred_region
        %s177 = ssub.s32 %s12, 1
        %s178 = sand.u32 %s39, 1
        %s179 = scalar_lea.sflag [#allocation3], %s178
        %s180 = sand.u32 %s39, 1
        %s181 = smul.addr %s180, 128
        %s182 = scalar_lea.vmem [#allocation2], %s181
        // Predicated region
        $region33: #{tpu_custom_call.1} parent=31 // pred_check
          %p183 = pneg %p52
        $region34: #{tpu_custom_call.1} parent=31 // pred_check_branch
          %185 = sbr.rel (%p183) target = $region36
        $region35: #{tpu_custom_call.1} parent=31 // pred_region
          %187 = dma.done %s179, 2048
        $region36: #{tpu_custom_call.1} parent=31 // pred_fallthru
          _
        %s188 = sand.u32 %s39, 1
        %s189 = scalar_lea.sflag [#allocation3], %s188
        %s190 = sand.u32 %s39, 1
        %s191 = smul.addr %s190, 128
        %s192 = scalar_lea.vmem [#allocation2], %s191
        %p193 = pneg %p52
        %p194 = pneg %p49
        %p195 = pneg %p73
        %p196 = pneg %p70
        %p197 = pneg %p94
        %p198 = pneg %p91
        %p199 = pneg %p122
        %p200 = pneg %p119
        %s201 = smul.u32 2, %s22
        %p202 = scmp.lt.s32.totalorder %s21, 1
        %s203 = scalar_select %p202, %s21, 1
        %p204 = scmp.lt.s32.totalorder %s201, 1
        %s205 = scalar_select %p204, %s201, 1
        %s206 = smul.addr %s203, 2
        %s207 = sadd.s32 %s205, %s206
        %s208 = smul.addr %s207, 8
        %s209 = scalar_lea.vmem %s3, %s208
        %s210 = smul.u32 2, %s22
        %s211 = smul.u32 2, %s22
        %p212 = scmp.lt.s32.totalorder %s21, 1
        %s213 = scalar_select %p212, %s21, 1
        %p214 = scmp.lt.s32.totalorder %s211, 1
        %s215 = scalar_select %p214, %s211, 1
        %s216 = smul.addr %s213, 2
        %s217 = sadd.s32 %s215, %s216
        %s218 = smul.addr %s217, 8
        %s219 = scalar_lea.vmem %s3, %s218
        %s220 = smul.u32 2, %s22
        %v221 = vld [vmem:[%s1] sm:$0x3f]
        %v222 = vld [vmem:[%s182] sm:$0xff]
        %v223 = vld [vmem:[%s182 + $0x8] sm:$0xff]
        %v224 = vld [vmem:[%s182 + $0x10] sm:$0xff]
        %v225 = vld [vmem:[%s182 + $0x18] sm:$0xff]
        %v226 = vld [vmem:[%s182 + $0x20] sm:$0xff]
        %v227 = vld [vmem:[%s182 + $0x28] sm:$0xff]
        %v228 = vld [vmem:[%s182 + $0x30] sm:$0xff]
        %v229 = vld [vmem:[%s182 + $0x38] sm:$0xff]
        %v230 = vld [vmem:[%s182 + $0x40] sm:$0xff]
        %v231 = vld [vmem:[%s182 + $0x48] sm:$0xff]
        %v232 = vld [vmem:[%s182 + $0x50] sm:$0xff]
        %v233 = vld [vmem:[%s182 + $0x58] sm:$0xff]
        %v234 = vld [vmem:[%s182 + $0x60] sm:$0xff]
        %v235 = vld [vmem:[%s182 + $0x68] sm:$0xff]
        %v236 = vld [vmem:[%s182 + $0x70] sm:$0xff]
        %v237 = vld [vmem:[%s182 + $0x78] sm:$0xff]
        %v238 = vld [vmem:[%s2] sm:$0x3f]
        %240 = vset.pattern.permute.xlu0 0
        %241 = vperm.xlu0 %240, %v238
        %v242 = vpop.permute.xlu0 %241
        %vm244 = vcmask 523264
        %v246 = vsel %vm244, %v221, 0
        %248 = vmatpush.msra.mxu0 0.0
        %249 = vmatpush.msra.mxu0 0.0
        %250 = vmatpush.msra.mxu0 0.0
        %251 = vmatpush.msra.mxu0 0.0
        %252 = vmatpush.msra.mxu0 0.0
        %253 = vmatpush.msra.mxu0 0.0
        %254 = vmatpush.msra.mxu0 0.0
        %255 = vmatpush.msra.mxu0 0.0
        %256 = vmatpush.msra.mxu0 %v236
        %257 = vmatpush.msra.mxu0 %v234
        %258 = vmatpush.msra.mxu0 %v232
        %259 = vmatpush.msra.mxu0 %v230
        %260 = vmatpush.msra.mxu0 %v228
        %261 = vmatpush.msra.mxu0 %v226
        %262 = vmatpush.msra.mxu0 %v224
        %263 = vmatpush.msra.mxu0 %v222
        %264 = vmatmul.f32.gmra.mxu0 %v246
        %v265 = vpop.f32.mrf.mxu0
        %v266 = vadd.f32 %v242, %v265
        %267 = vdwg.mxu0
        %268 = vmatpush.msra.mxu0 0.0
        %269 = vmatpush.msra.mxu0 0.0
        %270 = vmatpush.msra.mxu0 0.0
        %271 = vmatpush.msra.mxu0 0.0
        %272 = vmatpush.msra.mxu0 0.0
        %273 = vmatpush.msra.mxu0 0.0
        %274 = vmatpush.msra.mxu0 0.0
        %275 = vmatpush.msra.mxu0 0.0
        %276 = vmatpush.msra.mxu0 %v237
        %277 = vmatpush.msra.mxu0 %v235
        %278 = vmatpush.msra.mxu0 %v233
        %279 = vmatpush.msra.mxu0 %v231
        %280 = vmatpush.msra.mxu0 %v229
        %281 = vmatpush.msra.mxu0 %v227
        %282 = vmatpush.msra.mxu0 %v225
        %283 = vmatpush.msra.mxu0 %v223
        %284 = vmatmul.f32.gmra.mxu0 %v246
        %v285 = vpop.f32.mrf.mxu0
        %v286 = vadd.f32 %v242, %v285
        %287 = vdwg.mxu0
        %288 = vst [vmem:[%s219] sm:$0x3f] %v266
        %289 = vst [vmem:[%s219 + $0x8] sm:$0x3f] %v286
        %s290 = smul.u32 2, %s22
        %p291 = scmp.lt.s32.totalorder %s21, 1
        %s292 = scalar_select %p291, %s21, 1
        %p293 = scmp.lt.s32.totalorder %s290, 1
        %s294 = scalar_select %p293, %s290, 1
        %s295 = smul.addr %s292, 2
        %s296 = sadd.s32 %s294, %s295
        %s297 = smul.addr %s296, 8
        %s298 = scalar_lea.vmem %s3, %s297
        // Predicated region
        $region37: #{tpu_custom_call.1} parent=31 // pred_check
          %p299 = pneg %p119
        $region38: #{tpu_custom_call.1} parent=31 // pred_check_branch
          %301 = sbr.rel (%p299) target = $region40
        $region39: #{tpu_custom_call.1} parent=31 // pred_region
          %s302 = smul.u32 2, %s22
        $region40: #{tpu_custom_call.1} parent=31 // pred_fallthru
          _
      $region32: #{tpu_custom_call.1} parent=5 // pred_fallthru
        _
      %p303 = scmp.le.s32.totalorder 2, %s12
      // Predicated region
      $region41: #{tpu_custom_call.1} parent=5 // pred_check
        %p304 = pneg %p303
      $region42: #{tpu_custom_call.1} parent=5 // pred_check_branch
        %306 = sbr.rel (%p304) target = $region44
      $region43: #{tpu_custom_call.1} parent=5 // pred_region
        %s307 = ssub.s32 %s12, 2
        // Predicated region
        $region45: #{tpu_custom_call.1} parent=43 // pred_check
          %p308 = pneg %p125
        $region46: #{tpu_custom_call.1} parent=43 // pred_check_branch
          %310 = sbr.rel (%p308) target = $region48
        $region47: #{tpu_custom_call.1} parent=43 // pred_region
          %s311 = smul.u32 2, %s24
          %p312 = scmp.lt.s32.totalorder %s23, 1
          %s313 = scalar_select %p312, %s23, 1
          %p314 = scmp.lt.s32.totalorder %s311, 1
          %s315 = scalar_select %p314, %s311, 1
          %s316 = smul.addr %s313, 2
          %s317 = sadd.s32 %s315, %s316
          %s318 = smul.addr %s317, 8
          %s319 = scalar_lea.vmem %s3, %s318
        $region48: #{tpu_custom_call.1} parent=43 // pred_fallthru
          _
      $region44: #{tpu_custom_call.1} parent=5 // pred_fallthru
        _
    $region6: #{tpu_custom_call.1} parent=1 // loop_footer
      %s16 = sadd.s32 1, %s12
    $region7: #{tpu_custom_call.1} parent=1 // loop_footer_branch
      %11 = sbr.rel target = $region3
    $region8: #{tpu_custom_call.1} parent=1 // loop_exit
      _
    %320 = vsyncpa [#allocation3], 1
    %s321 = scalar_lea.sflag [#allocation3], 1
    %322 = vsyncpa %s321, 1

</llo_original>
